<compile_context>
chip_gen: v6e
topology: v6e:2x2x1
jax: 0.10.0
libtpu: 0.0.40
codegen_flags: <defaults>
</compile_context>

<pallas_src>
import math

import jax
import jax.numpy as jnp
from jax.experimental import pallas as pl
from jax.experimental.pallas import tpu as pltpu

STATE_DIM = 16
ACTION_DIM = 4
HIDDEN = 64
LOG2PI = math.log(2.0 * math.pi)

LANES = 2 * HIDDEN      # 128: fused hidden width (actor half | critic half)
OUT_W = 8               # packed output lanes per row
VALUE_LANE = 4          # lane carrying the critic value
LOGPROB_LANE = 5        # lane carrying the MVN log-prob


def _round_up(x, m):
    return (x + m - 1) // m * m


def fused_actor_critic_kernel(s_ref, a_ref, w1, b1, w2, b2, w3, b3,
                              nivar, onehot, out_ref):
    """One batch tile of the fused actor+critic evaluate().

    s_ref  : (TB, 16)   state rows
    a_ref  : (TB, 4)    action rows
    w1     : (16, 128)  [actor_l1 | critic_l1];             b1: (1, 128)
    w2     : (128, 128) blockdiag(actor_l2, critic_l2);     b2: (1, 128)
    w3     : (128, 8)   cols [0:A]=actor_l3, col 4=critic_l3
    b3     : (1, 8)     biases; lane 5 holds -0.5*(logdet + A*log(2pi))
    nivar  : (1, 4)     -0.5 / action_var
    onehot : (1, 8)     1.0 at the log-prob lane, 0 elsewhere
    out_ref: (TB, 8)    lanes [0:A]=mean, 4=value, 5=log_prob, 6-7 pad
    """
    h = jnp.tanh(jnp.dot(s_ref[...], w1[...],
                         preferred_element_type=jnp.float32) + b1[...])
    h = jnp.tanh(jnp.dot(h, w2[...],
                         preferred_element_type=jnp.float32) + b2[...])
    o = jnp.dot(h, w3[...], preferred_element_type=jnp.float32) + b3[...]  # (TB, 8)

    # -0.5 * sum(diff^2 / var); the constant part of log_prob is already in b3,
    # so adding this on the log-prob lane yields the complete MVN log-prob.
    diff = a_ref[...] - o[:, :ACTION_DIM]                                  # (TB, 4)
    qnh = jnp.sum(diff * diff * nivar[...], axis=-1, keepdims=True)        # (TB, 1)
    out_ref[...] = o + qnh * onehot[...]


def fuse_params(params, action_var):
    """Build the fused weights/biases and constants once, outside the kernel."""
    wa1, ba1, wa2, ba2, wa3, ba3, wc1, bc1, wc2, bc2, wc3, bc3 = params
    H, A = HIDDEN, ACTION_DIM

    w1 = jnp.concatenate([wa1, wc1], axis=-1)                    # (16, 128)
    b1 = jnp.concatenate([ba1, bc1], axis=-1)                    # (1, 128)

    w2 = jnp.zeros((LANES, LANES), jnp.float32)
    w2 = w2.at[:H, :H].set(wa2).at[H:, H:].set(wc2)              # (128, 128)
    b2 = jnp.concatenate([ba2, bc2], axis=-1)                    # (1, 128)

    logdet = jnp.sum(jnp.log(action_var))                        # batch-invariant
    lp_const = -0.5 * (logdet + A * LOG2PI)

    w3 = jnp.zeros((LANES, OUT_W), jnp.float32)
    w3 = w3.at[:H, :A].set(wa3).at[H:, VALUE_LANE:VALUE_LANE + 1].set(wc3)
    b3 = jnp.zeros((1, OUT_W), jnp.float32)
    b3 = (b3.at[0, :A].set(ba3[0])
             .at[0, VALUE_LANE].set(bc3[0, 0])
             .at[0, LOGPROB_LANE].set(lp_const))

    nivar = (-0.5 / action_var).astype(jnp.float32)              # (1, 4)
    onehot = jnp.zeros((1, OUT_W), jnp.float32).at[0, LOGPROB_LANE].set(1.0)

    entropy_const = 0.5 * logdet + 0.5 * A * (1.0 + LOG2PI)      # batch-invariant
    return (w1, b1, w2, b2, w3, b3, nivar, onehot), entropy_const


def _choose_tiling(B, tile_b):
    """Pick (tb, Bp): tb multiple of 8, padding waste small, >=2 tiles when possible."""
    B8 = _round_up(max(B, 8), 8)
    ntiles = max(1, pl.cdiv(B8, tile_b))
    if ntiles == 1 and B8 >= 16:
        ntiles = 2          # v7x: give both TensorCores at least one tile
    tb = _round_up(pl.cdiv(B8, ntiles), 8)
    return tb, tb * ntiles


def actor_critic_evaluate(state, action, action_var, params, *, tile_b=2048):
    """Returns (action_logprobs [B], state_values [B,1], dist_entropy [B])."""
    assert ACTION_DIM <= VALUE_LANE < LOGPROB_LANE < OUT_W
    B = state.shape[0]

    consts, entropy_const = fuse_params(params, action_var)

    # Large batch tiles amortize the ~0.35us per-grid-step cost; pad batch to a
    # tile multiple (padded rows compute finite garbage and are sliced off).
    tb, Bp = _choose_tiling(B, tile_b)
    if Bp != B:
        state = jnp.pad(state, ((0, Bp - B), (0, 0)))
        action = jnp.pad(action, ((0, Bp - B), (0, 0)))

    def const_spec(arr):
        # Constant operands: full-array block, never re-fetched across tiles.
        # (pl.Buffered(1) would also drop the second buffer; skipped for safety.)
        return pl.BlockSpec(arr.shape, lambda i: (0, 0))

    packed = pl.pallas_call(
        fused_actor_critic_kernel,
        out_shape=jax.ShapeDtypeStruct((Bp, OUT_W), jnp.float32),
        grid_spec=pltpu.PrefetchScalarGridSpec(
            num_scalar_prefetch=0,
            grid=(Bp // tb,),
            in_specs=[pl.BlockSpec((tb, STATE_DIM), lambda i: (i, 0)),
                      pl.BlockSpec((tb, ACTION_DIM), lambda i: (i, 0))]
                     + [const_spec(p) for p in consts],
            out_specs=pl.BlockSpec((tb, OUT_W), lambda i: (i, 0)),
        ),
        compiler_params=pltpu.CompilerParams(
            dimension_semantics=("parallel",),
        ),
    )(state, action, *consts)

    logprob = packed[:B, LOGPROB_LANE]                       # (B,)
    value = packed[:B, VALUE_LANE:VALUE_LANE + 1]            # (B, 1)
    entropy = jnp.broadcast_to(entropy_const, (B,))          # (B,)
    return logprob, value, entropy


def init_linear(key, fan_in, fan_out):
    # PyTorch nn.Linear default init: U(-1/sqrt(fan_in), 1/sqrt(fan_in)).
    kw, kb = jax.random.split(key)
    bound = 1.0 / math.sqrt(fan_in)
    w = jax.random.uniform(kw, (fan_in, fan_out), jnp.float32, -bound, bound)
    b = jax.random.uniform(kb, (1, fan_out), jnp.float32, -bound, bound)
    return w, b


def reference_evaluate(state, action, action_var, params):
    wa1, ba1, wa2, ba2, wa3, ba3, wc1, bc1, wc2, bc2, wc3, bc3 = params
    h = jnp.tanh(state @ wa1 + ba1)
    h = jnp.tanh(h @ wa2 + ba2)
    mean = h @ wa3 + ba3
    g = jnp.tanh(state @ wc1 + bc1)
    g = jnp.tanh(g @ wc2 + bc2)
    value = g @ wc3 + bc3
    d = ACTION_DIM
    diff = action - mean
    quad = jnp.sum(diff * diff / action_var, axis=-1)
    logdet = jnp.sum(jnp.log(action_var))
    logprob = -0.5 * (quad + logdet + d * LOG2PI)
    entropy = jnp.full((state.shape[0],), 0.5 * logdet + 0.5 * d * (1.0 + LOG2PI))
    return logprob, value, entropy


if __name__ == "__main__":
    key = jax.random.PRNGKey(0)
    keys = jax.random.split(key, 8)

    # Parameters (actor then critic), deterministically initialized.
    wa1, ba1 = init_linear(keys[0], STATE_DIM, HIDDEN)
    wa2, ba2 = init_linear(keys[1], HIDDEN, HIDDEN)
    wa3, ba3 = init_linear(keys[2], HIDDEN, ACTION_DIM)
    wc1, bc1 = init_linear(keys[3], STATE_DIM, HIDDEN)
    wc2, bc2 = init_linear(keys[4], HIDDEN, HIDDEN)
    wc3, bc3 = init_linear(keys[5], HIDDEN, 1)
    params = (wa1, ba1, wa2, ba2, wa3, ba3, wc1, bc1, wc2, bc2, wc3, bc3)

    action_std_init = 0.6
    action_var = jnp.full((1, ACTION_DIM), action_std_init * action_std_init, jnp.float32)

    B = 16
    state = jax.random.normal(keys[6], (B, STATE_DIM), jnp.float32)
    action = jax.random.normal(keys[7], (B, ACTION_DIM), jnp.float32)

    logprob, value, entropy = actor_critic_evaluate(state, action, action_var, params)
    jax.block_until_ready((logprob, value, entropy))

    # TODO(synk): ActorCritic.act()'s dist.sample() (stochastic draw) is not reproduced;
    # only the deterministic evaluate() path is implemented in the kernel.

    ref_lp, ref_v, ref_e = reference_evaluate(state, action, action_var, params)
    assert jnp.allclose(logprob, ref_lp, atol=1e-4, rtol=1e-4)
    assert jnp.allclose(value, ref_v, atol=1e-4, rtol=1e-4)
    assert jnp.allclose(entropy, ref_e, atol=1e-4, rtol=1e-4)

    print("KERNEL_OK")
</pallas_src>

<mosaic_0001>
module attributes {stable_mosaic.version = 11 : i64} {
  func.func @fused_actor_critic_kernel(%arg0: i32, %arg1: memref<8x16xf32, #tpu.memory_space<vmem>>, %arg2: memref<8x4xf32, #tpu.memory_space<vmem>>, %arg3: memref<16x128xf32, #tpu.memory_space<vmem>>, %arg4: memref<1x128xf32, #tpu.memory_space<vmem>>, %arg5: memref<128x128xf32, #tpu.memory_space<vmem>>, %arg6: memref<1x128xf32, #tpu.memory_space<vmem>>, %arg7: memref<128x8xf32, #tpu.memory_space<vmem>>, %arg8: memref<1x8xf32, #tpu.memory_space<vmem>>, %arg9: memref<1x4xf32, #tpu.memory_space<vmem>>, %arg10: memref<1x8xf32, #tpu.memory_space<vmem>>, %arg11: memref<8x8xf32, #tpu.memory_space<vmem>>) attributes {dimension_semantics = [#tpu.dimension_semantics<parallel>], iteration_bounds = array<i64: 2>, scalar_prefetch = 0 : i64, scratch_operands = 0 : i64, tpu.core_type = #tpu.core_type<tc>, window_params = [{transform_indices = @transform_0, window_bounds = array<i64: 8, 16>}, {transform_indices = @transform_1, window_bounds = array<i64: 8, 4>}, {pipeline_mode = #tpu.pipeline_mode<synchronous>, transform_indices = @transform_2, window_bounds = array<i64: 16, 128>}, {pipeline_mode = #tpu.pipeline_mode<synchronous>, transform_indices = @transform_3, window_bounds = array<i64: 1, 128>}, {pipeline_mode = #tpu.pipeline_mode<synchronous>, transform_indices = @transform_4, window_bounds = array<i64: 128, 128>}, {pipeline_mode = #tpu.pipeline_mode<synchronous>, transform_indices = @transform_5, window_bounds = array<i64: 1, 128>}, {pipeline_mode = #tpu.pipeline_mode<synchronous>, transform_indices = @transform_6, window_bounds = array<i64: 128, 8>}, {pipeline_mode = #tpu.pipeline_mode<synchronous>, transform_indices = @transform_7, window_bounds = array<i64: 1, 8>}, {pipeline_mode = #tpu.pipeline_mode<synchronous>, transform_indices = @transform_8, window_bounds = array<i64: 1, 4>}, {pipeline_mode = #tpu.pipeline_mode<synchronous>, transform_indices = @transform_9, window_bounds = array<i64: 1, 8>}, {transform_indices = @transform_10, window_bounds = array<i64: 8, 8>}]} {
    %c0 = arith.constant 0 : index
    %c0_0 = arith.constant 0 : index
    %0 = vector.load %arg1[%c0, %c0_0] : memref<8x16xf32, #tpu.memory_space<vmem>>, vector<8x16xf32>
    %c0_1 = arith.constant 0 : index
    %c0_2 = arith.constant 0 : index
    %1 = vector.load %arg3[%c0_1, %c0_2] : memref<16x128xf32, #tpu.memory_space<vmem>>, vector<16x128xf32>
    %cst = arith.constant dense<0.000000e+00> : vector<8x128xf32>
    %2 = tpu.matmul %0, %1, %cst {dimension_numbers = #tpu.dot_dimension_numbers<[1], [0], [0], [1], [0, 0, 1, 1], [], []>} : vector<8x16xf32>, vector<16x128xf32>, vector<8x128xf32> -> vector<8x128xf32>
    %c0_3 = arith.constant 0 : index
    %c0_4 = arith.constant 0 : index
    %3 = vector.load %arg4[%c0_3, %c0_4] : memref<1x128xf32, #tpu.memory_space<vmem>>, vector<1x128xf32>
    %4 = vector.broadcast %3 : vector<1x128xf32> to vector<8x128xf32>
    %5 = arith.addf %2, %4 : vector<8x128xf32>
    %6 = math.tanh %5 : vector<8x128xf32>
    %c0_5 = arith.constant 0 : index
    %c0_6 = arith.constant 0 : index
    %7 = vector.load %arg5[%c0_5, %c0_6] : memref<128x128xf32, #tpu.memory_space<vmem>>, vector<128x128xf32>
    %cst_7 = arith.constant dense<0.000000e+00> : vector<8x128xf32>
    %8 = tpu.matmul %6, %7, %cst_7 {dimension_numbers = #tpu.dot_dimension_numbers<[1], [0], [0], [1], [0, 0, 1, 1], [], []>} : vector<8x128xf32>, vector<128x128xf32>, vector<8x128xf32> -> vector<8x128xf32>
    %c0_8 = arith.constant 0 : index
    %c0_9 = arith.constant 0 : index
    %9 = vector.load %arg6[%c0_8, %c0_9] : memref<1x128xf32, #tpu.memory_space<vmem>>, vector<1x128xf32>
    %10 = vector.broadcast %9 : vector<1x128xf32> to vector<8x128xf32>
    %11 = arith.addf %8, %10 : vector<8x128xf32>
    %12 = math.tanh %11 : vector<8x128xf32>
    %c0_10 = arith.constant 0 : index
    %c0_11 = arith.constant 0 : index
    %13 = vector.load %arg7[%c0_10, %c0_11] : memref<128x8xf32, #tpu.memory_space<vmem>>, vector<128x8xf32>
    %cst_12 = arith.constant dense<0.000000e+00> : vector<8x8xf32>
    %14 = tpu.matmul %12, %13, %cst_12 {dimension_numbers = #tpu.dot_dimension_numbers<[1], [0], [0], [1], [0, 0, 1, 1], [], []>} : vector<8x128xf32>, vector<128x8xf32>, vector<8x8xf32> -> vector<8x8xf32>
    %c0_13 = arith.constant 0 : index
    %c0_14 = arith.constant 0 : index
    %15 = vector.load %arg8[%c0_13, %c0_14] : memref<1x8xf32, #tpu.memory_space<vmem>>, vector<1x8xf32>
    %16 = vector.broadcast %15 : vector<1x8xf32> to vector<8x8xf32>
    %17 = arith.addf %14, %16 : vector<8x8xf32>
    %c0_15 = arith.constant 0 : index
    %c0_16 = arith.constant 0 : index
    %18 = vector.load %arg2[%c0_15, %c0_16] : memref<8x4xf32, #tpu.memory_space<vmem>>, vector<8x4xf32>
    %19 = vector.extract_strided_slice %17 {offsets = [0, 0], sizes = [8, 4], strides = [1, 1]} : vector<8x8xf32> to vector<8x4xf32>
    %20 = arith.subf %18, %19 : vector<8x4xf32>
    %21 = arith.mulf %20, %20 : vector<8x4xf32>
    %c0_17 = arith.constant 0 : index
    %c0_18 = arith.constant 0 : index
    %22 = vector.load %arg9[%c0_17, %c0_18] : memref<1x4xf32, #tpu.memory_space<vmem>>, vector<1x4xf32>
    %23 = vector.broadcast %22 : vector<1x4xf32> to vector<8x4xf32>
    %24 = arith.mulf %21, %23 : vector<8x4xf32>
    %cst_19 = arith.constant dense<0.000000e+00> : vector<8xf32>
    %25 = vector.multi_reduction <add>, %24, %cst_19 [1] : vector<8x4xf32> to vector<8xf32>
    %26 = vector.shape_cast %25 : vector<8xf32> to vector<8x1xf32>
    %c0_20 = arith.constant 0 : index
    %c0_21 = arith.constant 0 : index
    %27 = vector.load %arg10[%c0_20, %c0_21] : memref<1x8xf32, #tpu.memory_space<vmem>>, vector<1x8xf32>
    %28 = vector.broadcast %26 : vector<8x1xf32> to vector<8x8xf32>
    %29 = vector.broadcast %27 : vector<1x8xf32> to vector<8x8xf32>
    %30 = arith.mulf %28, %29 : vector<8x8xf32>
    %31 = arith.addf %17, %30 : vector<8x8xf32>
    %c0_22 = arith.constant 0 : index
    %c0_23 = arith.constant 0 : index
    %32 = vector.load %arg11[%c0_22, %c0_23] : memref<8x8xf32, #tpu.memory_space<vmem>>, vector<8x8xf32>
    tpu.vector_store %arg11[%c0_22, %c0_23], %31 {strides = array<i32>} : memref<8x8xf32, #tpu.memory_space<vmem>>, vector<8x8xf32>,
    return
  }
  func.func @transform_0(%arg0: i32) -> (i32, i32) {
    %c0_i32 = arith.constant 0 : i32
    %c0_i32_0 = arith.constant 0 : i32
    return %arg0, %c0_i32 : i32, i32
  }
  func.func @transform_1(%arg0: i32) -> (i32, i32) {
    %c0_i32 = arith.constant 0 : i32
    %c0_i32_0 = arith.constant 0 : i32
    return %arg0, %c0_i32 : i32, i32
  }
  func.func @transform_2(%arg0: i32) -> (i32, i32) {
    %c0_i32 = arith.constant 0 : i32
    %c0_i32_0 = arith.constant 0 : i32
    %c0_i32_1 = arith.constant 0 : i32
    return %c0_i32, %c0_i32_0 : i32, i32
  }
  func.func @transform_3(%arg0: i32) -> (i32, i32) {
    %c0_i32 = arith.constant 0 : i32
    %c0_i32_0 = arith.constant 0 : i32
    %c0_i32_1 = arith.constant 0 : i32
    return %c0_i32, %c0_i32_0 : i32, i32
  }
  func.func @transform_4(%arg0: i32) -> (i32, i32) {
    %c0_i32 = arith.constant 0 : i32
    %c0_i32_0 = arith.constant 0 : i32
    %c0_i32_1 = arith.constant 0 : i32
    return %c0_i32, %c0_i32_0 : i32, i32
  }
  func.func @transform_5(%arg0: i32) -> (i32, i32) {
    %c0_i32 = arith.constant 0 : i32
    %c0_i32_0 = arith.constant 0 : i32
    %c0_i32_1 = arith.constant 0 : i32
    return %c0_i32, %c0_i32_0 : i32, i32
  }
  func.func @transform_6(%arg0: i32) -> (i32, i32) {
    %c0_i32 = arith.constant 0 : i32
    %c0_i32_0 = arith.constant 0 : i32
    %c0_i32_1 = arith.constant 0 : i32
    return %c0_i32, %c0_i32_0 : i32, i32
  }
  func.func @transform_7(%arg0: i32) -> (i32, i32) {
    %c0_i32 = arith.constant 0 : i32
    %c0_i32_0 = arith.constant 0 : i32
    %c0_i32_1 = arith.constant 0 : i32
    return %c0_i32, %c0_i32_0 : i32, i32
  }
  func.func @transform_8(%arg0: i32) -> (i32, i32) {
    %c0_i32 = arith.constant 0 : i32
    %c0_i32_0 = arith.constant 0 : i32
    %c0_i32_1 = arith.constant 0 : i32
    return %c0_i32, %c0_i32_0 : i32, i32
  }
  func.func @transform_9(%arg0: i32) -> (i32, i32) {
    %c0_i32 = arith.constant 0 : i32
    %c0_i32_0 = arith.constant 0 : i32
    %c0_i32_1 = arith.constant 0 : i32
    return %c0_i32, %c0_i32_0 : i32, i32
  }
  func.func @transform_10(%arg0: i32) -> (i32, i32) {
    %c0_i32 = arith.constant 0 : i32
    %c0_i32_0 = arith.constant 0 : i32
    return %arg0, %c0_i32 : i32, i32
  }
}

</mosaic_0001>

<llo_original>
// kernel: tpu_custom_call.1
$region0: #{tpu_custom_call.1}
  #allocation0 [shape = 'u32[]', space=smem, size = 0x4, offset = 0x4, fixed_abs, tag = 'smem constant byte address 0x4 - core index']
  #allocation1 [shape = 'u32[144,128]{1,0:T(1,128)}', space=vmem, size = 0x12000, scoped, tag = 'internal scratch']
  %s0 = inlined_call_operand.vmem [shape: f32[16,16], index: 0, kind: input, shape index: {}]
  %s1 = inlined_call_operand.vmem [shape: f32[16,4], index: 1, kind: input, shape index: {}]
  %s2 = inlined_call_operand.vmem [shape: f32[16,128], index: 2, kind: input, shape index: {}]
  %s3 = inlined_call_operand.vmem [shape: f32[1,128], index: 3, kind: input, shape index: {}]
  %s4 = inlined_call_operand.vmem [shape: f32[128,128], index: 4, kind: input, shape index: {}]
  %s5 = inlined_call_operand.vmem [shape: f32[1,128], index: 5, kind: input, shape index: {}]
  %s6 = inlined_call_operand.vmem [shape: f32[128,8], index: 6, kind: input, shape index: {}]
  %s7 = inlined_call_operand.vmem [shape: f32[1,8], index: 7, kind: input, shape index: {}]
  %s8 = inlined_call_operand.vmem [shape: f32[1,4], index: 8, kind: input, shape index: {}]
  %s9 = inlined_call_operand.vmem [shape: f32[1,8], index: 9, kind: input, shape index: {}]
  %s10 = inlined_call_operand.vmem [shape: f32[16,8], index: 10, kind: output, shape index: {}]
  %s11 = sld [smem:[#allocation0]]
  $region73: #{tpu_custom_call.1} parent=0
    _
  %s13 = ssub.s32 1, %s11
  %s14 = scalar_select 0, %s13, %s11
  loop: start=0, step=1, limit=4
  $region2: #{tpu_custom_call.1} parent=0 // loop_pre_header
    _
  $region3: #{tpu_custom_call.1} parent=0 // loop_header
    %s16 = sphi 0, %s20
    %p17 = scmp.ge.s32.totalorder %s16, 4
    %s26 = sphi 0, %s28
    %s29 = sphi 0, %s26
    %s30 = sphi 0, %s29
    %s46 = sphi 0, %s30
    %s52 = sphi 0, %s54
    %s55 = sphi 0, %s52
    %s56 = sphi 0, %s55
    %s72 = sphi 0, %s56
    %s76 = sphi 0, %s76
    %s78 = sphi 0, %s76
    %s79 = sphi 0, %s78
    %s93 = sphi 0, %s79
    %s97 = sphi 0, %s97
    %s99 = sphi 0, %s97
    %s100 = sphi 0, %s99
    %s114 = sphi 0, %s100
    %s118 = sphi 0, %s118
    %s120 = sphi 0, %s118
    %s121 = sphi 0, %s120
    %s135 = sphi 0, %s121
    %s139 = sphi 0, %s139
    %s141 = sphi 0, %s139
    %s142 = sphi 0, %s141
    %s156 = sphi 0, %s142
    %s160 = sphi 0, %s160
    %s162 = sphi 0, %s160
    %s163 = sphi 0, %s162
    %s177 = sphi 0, %s163
    %s181 = sphi 0, %s181
    %s183 = sphi 0, %s181
    %s184 = sphi 0, %s183
    %s198 = sphi 0, %s184
    %s202 = sphi 0, %s202
    %s204 = sphi 0, %s202
    %s205 = sphi 0, %s204
    %s219 = sphi 0, %s205
    %s223 = sphi 0, %s223
    %s225 = sphi 0, %s223
    %s226 = sphi 0, %s225
    %s240 = sphi 0, %s226
    %s246 = sphi 0, %s248
    %s249 = sphi 0, %s246
    %s250 = sphi 0, %s249
    %s266 = sphi 0, %s250
  $region4: #{tpu_custom_call.1} parent=0 // loop_header_branch
    %19 = sbr.rel (%p17) target = $region8
  $region5: #{tpu_custom_call.1} parent=0 // loop_body
    %s21 = ssub.s32 %s16, 1
    %s22 = ssub.s32 %s16, 2
    %s23 = sadd.s32 %s16, 1
    %s24 = ssub.s32 %s16, %s23
    %p25 = scmp.eq.s32.totalorder %s24, 0
    %s27 = sadd.s32 %s26, 1
    %s28 = scalar_select %p25, %s26, %s27
    %p31 = pneg %p25
    %p32 = scmp.eq.s32.totalorder %s16, 1
    %p33 = por %p31, %p32
    %p34 = scmp.ne.s32.totalorder %s26, %s29
    %p35 = scmp.eq.s32.totalorder %s16, 0
    %p36 = por %p34, %p35
    %p37 = scmp.ne.s32.totalorder %s26, %s29
    %p38 = scmp.eq.s32.totalorder %s21, 1
    %p39 = por %p37, %p38
    %p40 = scmp.ne.s32.totalorder %s29, %s30
    %p41 = scmp.eq.s32.totalorder %s21, 0
    %p42 = por %p40, %p41
    %p43 = scmp.ne.s32.totalorder %s29, %s30
    %p44 = scmp.eq.s32.totalorder %s22, 1
    %p45 = por %p43, %p44
    %p47 = scmp.ne.s32.totalorder %s30, %s46
    %p48 = scmp.eq.s32.totalorder %s22, 0
    %p49 = por %p47, %p48
    %s50 = ssub.s32 %s16, %s23
    %p51 = scmp.eq.s32.totalorder %s50, 0
    %s53 = sadd.s32 %s52, 1
    %s54 = scalar_select %p51, %s52, %s53
    %p57 = pneg %p51
    %p58 = scmp.eq.s32.totalorder %s16, 1
    %p59 = por %p57, %p58
    %p60 = scmp.ne.s32.totalorder %s52, %s55
    %p61 = scmp.eq.s32.totalorder %s16, 0
    %p62 = por %p60, %p61
    %p63 = scmp.ne.s32.totalorder %s52, %s55
    %p64 = scmp.eq.s32.totalorder %s21, 1
    %p65 = por %p63, %p64
    %p66 = scmp.ne.s32.totalorder %s55, %s56
    %p67 = scmp.eq.s32.totalorder %s21, 0
    %p68 = por %p66, %p67
    %p69 = scmp.ne.s32.totalorder %s55, %s56
    %p70 = scmp.eq.s32.totalorder %s22, 1
    %p71 = por %p69, %p70
    %p73 = scmp.ne.s32.totalorder %s56, %s72
    %p74 = scmp.eq.s32.totalorder %s22, 0
    %p75 = por %p73, %p74
    %s77 = sadd.s32 %s76, 1
    %p80 = scmp.eq.s32.totalorder %s16, 1
    %p81 = scmp.ne.s32.totalorder %s76, %s78
    %p82 = scmp.eq.s32.totalorder %s16, 0
    %p83 = por %p81, %p82
    %p84 = scmp.ne.s32.totalorder %s76, %s78
    %p85 = scmp.eq.s32.totalorder %s21, 1
    %p86 = por %p84, %p85
    %p87 = scmp.ne.s32.totalorder %s78, %s79
    %p88 = scmp.eq.s32.totalorder %s21, 0
    %p89 = por %p87, %p88
    %p90 = scmp.ne.s32.totalorder %s78, %s79
    %p91 = scmp.eq.s32.totalorder %s22, 1
    %p92 = por %p90, %p91
    %p94 = scmp.ne.s32.totalorder %s79, %s93
    %p95 = scmp.eq.s32.totalorder %s22, 0
    %p96 = por %p94, %p95
    %s98 = sadd.s32 %s97, 1
    %p101 = scmp.eq.s32.totalorder %s16, 1
    %p102 = scmp.ne.s32.totalorder %s97, %s99
    %p103 = scmp.eq.s32.totalorder %s16, 0
    %p104 = por %p102, %p103
    %p105 = scmp.ne.s32.totalorder %s97, %s99
    %p106 = scmp.eq.s32.totalorder %s21, 1
    %p107 = por %p105, %p106
    %p108 = scmp.ne.s32.totalorder %s99, %s100
    %p109 = scmp.eq.s32.totalorder %s21, 0
    %p110 = por %p108, %p109
    %p111 = scmp.ne.s32.totalorder %s99, %s100
    %p112 = scmp.eq.s32.totalorder %s22, 1
    %p113 = por %p111, %p112
    %p115 = scmp.ne.s32.totalorder %s100, %s114
    %p116 = scmp.eq.s32.totalorder %s22, 0
    %p117 = por %p115, %p116
    %s119 = sadd.s32 %s118, 1
    %p122 = scmp.eq.s32.totalorder %s16, 1
    %p123 = scmp.ne.s32.totalorder %s118, %s120
    %p124 = scmp.eq.s32.totalorder %s16, 0
    %p125 = por %p123, %p124
    %p126 = scmp.ne.s32.totalorder %s118, %s120
    %p127 = scmp.eq.s32.totalorder %s21, 1
    %p128 = por %p126, %p127
    %p129 = scmp.ne.s32.totalorder %s120, %s121
    %p130 = scmp.eq.s32.totalorder %s21, 0
    %p131 = por %p129, %p130
    %p132 = scmp.ne.s32.totalorder %s120, %s121
    %p133 = scmp.eq.s32.totalorder %s22, 1
    %p134 = por %p132, %p133
    %p136 = scmp.ne.s32.totalorder %s121, %s135
    %p137 = scmp.eq.s32.totalorder %s22, 0
    %p138 = por %p136, %p137
    %s140 = sadd.s32 %s139, 1
    %p143 = scmp.eq.s32.totalorder %s16, 1
    %p144 = scmp.ne.s32.totalorder %s139, %s141
    %p145 = scmp.eq.s32.totalorder %s16, 0
    %p146 = por %p144, %p145
    %p147 = scmp.ne.s32.totalorder %s139, %s141
    %p148 = scmp.eq.s32.totalorder %s21, 1
    %p149 = por %p147, %p148
    %p150 = scmp.ne.s32.totalorder %s141, %s142
    %p151 = scmp.eq.s32.totalorder %s21, 0
    %p152 = por %p150, %p151
    %p153 = scmp.ne.s32.totalorder %s141, %s142
    %p154 = scmp.eq.s32.totalorder %s22, 1
    %p155 = por %p153, %p154
    %p157 = scmp.ne.s32.totalorder %s142, %s156
    %p158 = scmp.eq.s32.totalorder %s22, 0
    %p159 = por %p157, %p158
    %s161 = sadd.s32 %s160, 1
    %p164 = scmp.eq.s32.totalorder %s16, 1
    %p165 = scmp.ne.s32.totalorder %s160, %s162
    %p166 = scmp.eq.s32.totalorder %s16, 0
    %p167 = por %p165, %p166
    %p168 = scmp.ne.s32.totalorder %s160, %s162
    %p169 = scmp.eq.s32.totalorder %s21, 1
    %p170 = por %p168, %p169
    %p171 = scmp.ne.s32.totalorder %s162, %s163
    %p172 = scmp.eq.s32.totalorder %s21, 0
    %p173 = por %p171, %p172
    %p174 = scmp.ne.s32.totalorder %s162, %s163
    %p175 = scmp.eq.s32.totalorder %s22, 1
    %p176 = por %p174, %p175
    %p178 = scmp.ne.s32.totalorder %s163, %s177
    %p179 = scmp.eq.s32.totalorder %s22, 0
    %p180 = por %p178, %p179
    %s182 = sadd.s32 %s181, 1
    %p185 = scmp.eq.s32.totalorder %s16, 1
    %p186 = scmp.ne.s32.totalorder %s181, %s183
    %p187 = scmp.eq.s32.totalorder %s16, 0
    %p188 = por %p186, %p187
    %p189 = scmp.ne.s32.totalorder %s181, %s183
    %p190 = scmp.eq.s32.totalorder %s21, 1
    %p191 = por %p189, %p190
    %p192 = scmp.ne.s32.totalorder %s183, %s184
    %p193 = scmp.eq.s32.totalorder %s21, 0
    %p194 = por %p192, %p193
    %p195 = scmp.ne.s32.totalorder %s183, %s184
    %p196 = scmp.eq.s32.totalorder %s22, 1
    %p197 = por %p195, %p196
    %p199 = scmp.ne.s32.totalorder %s184, %s198
    %p200 = scmp.eq.s32.totalorder %s22, 0
    %p201 = por %p199, %p200
    %s203 = sadd.s32 %s202, 1
    %p206 = scmp.eq.s32.totalorder %s16, 1
    %p207 = scmp.ne.s32.totalorder %s202, %s204
    %p208 = scmp.eq.s32.totalorder %s16, 0
    %p209 = por %p207, %p208
    %p210 = scmp.ne.s32.totalorder %s202, %s204
    %p211 = scmp.eq.s32.totalorder %s21, 1
    %p212 = por %p210, %p211
    %p213 = scmp.ne.s32.totalorder %s204, %s205
    %p214 = scmp.eq.s32.totalorder %s21, 0
    %p215 = por %p213, %p214
    %p216 = scmp.ne.s32.totalorder %s204, %s205
    %p217 = scmp.eq.s32.totalorder %s22, 1
    %p218 = por %p216, %p217
    %p220 = scmp.ne.s32.totalorder %s205, %s219
    %p221 = scmp.eq.s32.totalorder %s22, 0
    %p222 = por %p220, %p221
    %s224 = sadd.s32 %s223, 1
    %p227 = scmp.eq.s32.totalorder %s16, 1
    %p228 = scmp.ne.s32.totalorder %s223, %s225
    %p229 = scmp.eq.s32.totalorder %s16, 0
    %p230 = por %p228, %p229
    %p231 = scmp.ne.s32.totalorder %s223, %s225
    %p232 = scmp.eq.s32.totalorder %s21, 1
    %p233 = por %p231, %p232
    %p234 = scmp.ne.s32.totalorder %s225, %s226
    %p235 = scmp.eq.s32.totalorder %s21, 0
    %p236 = por %p234, %p235
    %p237 = scmp.ne.s32.totalorder %s225, %s226
    %p238 = scmp.eq.s32.totalorder %s22, 1
    %p239 = por %p237, %p238
    %p241 = scmp.ne.s32.totalorder %s226, %s240
    %p242 = scmp.eq.s32.totalorder %s22, 0
    %p243 = por %p241, %p242
    %s244 = ssub.s32 %s16, %s23
    %p245 = scmp.eq.s32.totalorder %s244, 0
    %s247 = sadd.s32 %s246, 1
    %s248 = scalar_select %p245, %s246, %s247
    %p251 = pneg %p245
    %p252 = scmp.eq.s32.totalorder %s16, 1
    %p253 = por %p251, %p252
    %p254 = scmp.ne.s32.totalorder %s246, %s249
    %p255 = scmp.eq.s32.totalorder %s16, 0
    %p256 = por %p254, %p255
    %p257 = scmp.ne.s32.totalorder %s246, %s249
    %p258 = scmp.eq.s32.totalorder %s21, 1
    %p259 = por %p257, %p258
    %p260 = scmp.ne.s32.totalorder %s249, %s250
    %p261 = scmp.eq.s32.totalorder %s21, 0
    %p262 = por %p260, %p261
    %p263 = scmp.ne.s32.totalorder %s249, %s250
    %p264 = scmp.eq.s32.totalorder %s22, 1
    %p265 = por %p263, %p264
    %p267 = scmp.ne.s32.totalorder %s250, %s266
    %p268 = scmp.eq.s32.totalorder %s22, 0
    %p269 = por %p267, %p268
    %p270 = scmp.le.s32.totalorder 1, %s16
    %p271 = scmp.lt.s32.totalorder %s16, 3
    %p272 = pnand %p270, %p271
    %p273 = pneg %p272
    // Predicated region
    $region9: #{tpu_custom_call.1} parent=5 // pred_check
      _
    $region10: #{tpu_custom_call.1} parent=5 // pred_check_branch
      %275 = sbr.rel (%p272) target = $region12
    $region11: #{tpu_custom_call.1} parent=5 // pred_region
      %s276 = ssub.s32 %s16, 1
      // Predicated region
      $region13: #{tpu_custom_call.1} parent=11 // pred_check
        %p277 = pneg %p89
      $region14: #{tpu_custom_call.1} parent=11 // pred_check_branch
        %279 = sbr.rel (%p277) target = $region16
      $region15: #{tpu_custom_call.1} parent=11 // pred_region
        _
      $region16: #{tpu_custom_call.1} parent=11 // pred_fallthru
        _
      // Predicated region
      $region17: #{tpu_custom_call.1} parent=11 // pred_check
        %p280 = pneg %p110
      $region18: #{tpu_custom_call.1} parent=11 // pred_check_branch
        %282 = sbr.rel (%p280) target = $region20
      $region19: #{tpu_custom_call.1} parent=11 // pred_region
        _
      $region20: #{tpu_custom_call.1} parent=11 // pred_fallthru
        _
      // Predicated region
      $region21: #{tpu_custom_call.1} parent=11 // pred_check
        %p283 = pneg %p131
      $region22: #{tpu_custom_call.1} parent=11 // pred_check_branch
        %285 = sbr.rel (%p283) target = $region24
      $region23: #{tpu_custom_call.1} parent=11 // pred_region
        _
      $region24: #{tpu_custom_call.1} parent=11 // pred_fallthru
        _
      // Predicated region
      $region25: #{tpu_custom_call.1} parent=11 // pred_check
        %p286 = pneg %p152
      $region26: #{tpu_custom_call.1} parent=11 // pred_check_branch
        %288 = sbr.rel (%p286) target = $region28
      $region27: #{tpu_custom_call.1} parent=11 // pred_region
        _
      $region28: #{tpu_custom_call.1} parent=11 // pred_fallthru
        _
      // Predicated region
      $region29: #{tpu_custom_call.1} parent=11 // pred_check
        %p289 = pneg %p173
      $region30: #{tpu_custom_call.1} parent=11 // pred_check_branch
        %291 = sbr.rel (%p289) target = $region32
      $region31: #{tpu_custom_call.1} parent=11 // pred_region
        _
      $region32: #{tpu_custom_call.1} parent=11 // pred_fallthru
        _
      // Predicated region
      $region33: #{tpu_custom_call.1} parent=11 // pred_check
        %p292 = pneg %p194
      $region34: #{tpu_custom_call.1} parent=11 // pred_check_branch
        %294 = sbr.rel (%p292) target = $region36
      $region35: #{tpu_custom_call.1} parent=11 // pred_region
        _
      $region36: #{tpu_custom_call.1} parent=11 // pred_fallthru
        _
      // Predicated region
      $region37: #{tpu_custom_call.1} parent=11 // pred_check
        %p295 = pneg %p215
      $region38: #{tpu_custom_call.1} parent=11 // pred_check_branch
        %297 = sbr.rel (%p295) target = $region40
      $region39: #{tpu_custom_call.1} parent=11 // pred_region
        _
      $region40: #{tpu_custom_call.1} parent=11 // pred_fallthru
        _
      // Predicated region
      $region41: #{tpu_custom_call.1} parent=11 // pred_check
        %p298 = pneg %p236
      $region42: #{tpu_custom_call.1} parent=11 // pred_check_branch
        %300 = sbr.rel (%p298) target = $region44
      $region43: #{tpu_custom_call.1} parent=11 // pred_region
        _
      $region44: #{tpu_custom_call.1} parent=11 // pred_fallthru
        _
    $region12: #{tpu_custom_call.1} parent=5 // pred_fallthru
      _
    %p301 = scmp.lt.s32.totalorder %s16, 2
    // Predicated region
    $region45: #{tpu_custom_call.1} parent=5 // pred_check
      %p302 = pneg %p301
    $region46: #{tpu_custom_call.1} parent=5 // pred_check_branch
      %304 = sbr.rel (%p302) target = $region48
    $region47: #{tpu_custom_call.1} parent=5 // pred_region
      // Predicated region
      $region49: #{tpu_custom_call.1} parent=47 // pred_check
        %p305 = pneg %p36
      $region50: #{tpu_custom_call.1} parent=47 // pred_check_branch
        %307 = sbr.rel (%p305) target = $region52
      $region51: #{tpu_custom_call.1} parent=47 // pred_region
        %p308 = scmp.lt.s32.totalorder %s16, 1
        %s309 = scalar_select %p308, %s16, 1
        %s310 = smul.addr %s309, 8
        %s311 = scalar_lea.vmem %s0, %s310
      $region52: #{tpu_custom_call.1} parent=47 // pred_fallthru
        _
      // Predicated region
      $region53: #{tpu_custom_call.1} parent=47 // pred_check
        %p312 = pneg %p62
      $region54: #{tpu_custom_call.1} parent=47 // pred_check_branch
        %314 = sbr.rel (%p312) target = $region56
      $region55: #{tpu_custom_call.1} parent=47 // pred_region
        %p315 = scmp.lt.s32.totalorder %s16, 1
        %s316 = scalar_select %p315, %s16, 1
        %s317 = smul.addr %s316, 8
        %s318 = scalar_lea.vmem %s1, %s317
      $region56: #{tpu_custom_call.1} parent=47 // pred_fallthru
        _
    $region48: #{tpu_custom_call.1} parent=5 // pred_fallthru
      _
    %p319 = scmp.le.s32.totalorder 1, %s16
    %p320 = scmp.lt.s32.totalorder %s16, 3
    %p321 = pnand %p319, %p320
    %p322 = pneg %p321
    // Predicated region
    $region57: #{tpu_custom_call.1} parent=5 // pred_check
      _
    $region58: #{tpu_custom_call.1} parent=5 // pred_check_branch
      %324 = sbr.rel (%p321) target = $region60
    $region59: #{tpu_custom_call.1} parent=5 // pred_region
      %s325 = ssub.s32 %s16, 1
      %p326 = scmp.lt.s32.totalorder %s21, 1
      %s327 = scalar_select %p326, %s21, 1
      %s328 = smul.addr %s327, 8
      %s329 = scalar_lea.vmem %s0, %s328
      %p330 = pneg %p42
      %p331 = pneg %p39
      %p332 = scmp.lt.s32.totalorder %s21, 1
      %s333 = scalar_select %p332, %s21, 1
      %s334 = smul.addr %s333, 8
      %s335 = scalar_lea.vmem %s1, %s334
      %p336 = pneg %p68
      %p337 = pneg %p65
      %p338 = pneg %p89
      %p339 = pneg %p86
      %p340 = pneg %p110
      %p341 = pneg %p107
      %p342 = pneg %p131
      %p343 = pneg %p128
      %p344 = pneg %p152
      %p345 = pneg %p149
      %p346 = pneg %p173
      %p347 = pneg %p170
      %p348 = pneg %p194
      %p349 = pneg %p191
      %p350 = pneg %p215
      %p351 = pneg %p212
      %p352 = pneg %p236
      %p353 = pneg %p233
      %p354 = pneg %p262
      %p355 = pneg %p259
      %p356 = scmp.lt.s32.totalorder %s21, 1
      %s357 = scalar_select %p356, %s21, 1
      %s358 = smul.addr %s357, 8
      %s359 = scalar_lea.vmem %s10, %s358
      %p360 = scmp.lt.s32.totalorder %s21, 1
      %s361 = scalar_select %p360, %s21, 1
      %s362 = smul.addr %s361, 8
      %s363 = scalar_lea.vmem %s0, %s362
      %p364 = scmp.lt.s32.totalorder %s21, 1
      %s365 = scalar_select %p364, %s21, 1
      %s366 = smul.addr %s365, 8
      %s367 = scalar_lea.vmem %s1, %s366
      %p368 = scmp.lt.s32.totalorder %s21, 1
      %s369 = scalar_select %p368, %s21, 1
      %s370 = smul.addr %s369, 8
      %s371 = scalar_lea.vmem %s10, %s370
      %v372 = vld [vmem:[%s363] sm:$0xff]
      %v373 = vld [vmem:[%s2] sm:$0xff]
      %v374 = vld [vmem:[%s2 + $0x8] sm:$0xff]
      %v375 = vld [vmem:[%s3] sm:$0x1]
      %v377 = vlaneseq
      %v378 = vshrl.u32 %v377, 7
      %v379 = vsub.s32 0, %v378
      %v380 = vrot.slane %v375, %v379
      %vm382 = vcmask 130048
      %v384 = vsel %vm382, %v372, 0
      %386 = vmatprep.subr.mxu0 0.0
      %387 = vmatpush1.msra.mxu0 0.0
      %388 = vmatprep.subr.mxu0 0.0
      %389 = vmatpush1.msra.mxu0 0.0
      %390 = vmatprep.subr.mxu0 0.0
      %391 = vmatpush1.msra.mxu0 0.0
      %392 = vmatprep.subr.mxu0 0.0
      %393 = vmatpush1.msra.mxu0 0.0
      %394 = vmatprep.subr.mxu0 0.0
      %395 = vmatpush1.msra.mxu0 0.0
      %396 = vmatprep.subr.mxu0 0.0
      %397 = vmatpush1.msra.mxu0 0.0
      %398 = vmatprep.subr.mxu0 0.0
      %399 = vmatpush1.msra.mxu0 0.0
      %400 = vmatprep.subr.mxu0 0.0
      %401 = vmatpush1.msra.mxu0 0.0
      %402 = vmatprep.subr.mxu0 0.0
      %403 = vmatpush1.msra.mxu0 0.0
      %404 = vmatprep.subr.mxu0 0.0
      %405 = vmatpush1.msra.mxu0 0.0
      %406 = vmatprep.subr.mxu0 0.0
      %407 = vmatpush1.msra.mxu0 0.0
      %408 = vmatprep.subr.mxu0 0.0
      %409 = vmatpush1.msra.mxu0 0.0
      %410 = vmatprep.subr.mxu0 0.0
      %411 = vmatpush1.msra.mxu0 0.0
      %412 = vmatprep.subr.mxu0 0.0
      %413 = vmatpush1.msra.mxu0 0.0
      %414 = vmatprep.subr.mxu0 0.0
      %415 = vmatpush1.msra.mxu0 %v374
      %416 = vmatprep.subr.mxu0 0.0
      %417 = vmatpush1.msra.mxu0 %v373
      %418 = vmatprep.subr.mxu0 0.0
      %419 = vmatpush2.msra.mxu0 0.0
      %420 = vmatprep.subr.mxu0 0.0
      %421 = vmatpush2.msra.mxu0 0.0
      %422 = vmatprep.subr.mxu0 0.0
      %423 = vmatpush2.msra.mxu0 0.0
      %424 = vmatprep.subr.mxu0 0.0
      %425 = vmatpush2.msra.mxu0 0.0
      %426 = vmatprep.subr.mxu0 0.0
      %427 = vmatpush2.msra.mxu0 0.0
      %428 = vmatprep.subr.mxu0 0.0
      %429 = vmatpush2.msra.mxu0 0.0
      %430 = vmatprep.subr.mxu0 0.0
      %431 = vmatpush2.msra.mxu0 0.0
      %432 = vmatprep.subr.mxu0 0.0
      %433 = vmatpush2.msra.mxu0 0.0
      %434 = vmatprep.subr.mxu0 0.0
      %435 = vmatpush2.msra.mxu0 0.0
      %436 = vmatprep.subr.mxu0 0.0
      %437 = vmatpush2.msra.mxu0 0.0
      %438 = vmatprep.subr.mxu0 0.0
      %439 = vmatpush2.msra.mxu0 0.0
      %440 = vmatprep.subr.mxu0 0.0
      %441 = vmatpush2.msra.mxu0 0.0
      %442 = vmatprep.subr.mxu0 0.0
      %443 = vmatpush2.msra.mxu0 0.0
      %444 = vmatprep.subr.mxu0 0.0
      %445 = vmatpush2.msra.mxu0 0.0
      %446 = vmatprep.subr.mxu0 0.0
      %447 = vmatpush2.msra.mxu0 0.0
      %448 = vmatprep.subr.mxu0 0.0
      %449 = vmatpush2.msra.mxu0 0.0
      %450 = vmatprep.mubr.f32.mxu0 0.0
      %451 = vmatmul.mubr.f32.gmra.mxu0 %v384
      %v452 = vpop.f32.mrf.mxu0
      %v453 = vadd.f32 %v380, %v452
      %v454 = vpop.f32.mrf.mxu0
      %455 = vdwg.mxu0
      %v456 = vtanh.pop %v453
      %v457 = vld [vmem:[%s4] sm:$0xff]
      %v458 = vld [vmem:[%s4 + $0x8] sm:$0xff]
      %v459 = vld [vmem:[%s4 + $0x10] sm:$0xff]
      %v460 = vld [vmem:[%s4 + $0x18] sm:$0xff]
      %v461 = vld [vmem:[%s4 + $0x20] sm:$0xff]
      %v462 = vld [vmem:[%s4 + $0x28] sm:$0xff]
      %v463 = vld [vmem:[%s4 + $0x30] sm:$0xff]
      %v464 = vld [vmem:[%s4 + $0x38] sm:$0xff]
      %v465 = vld [vmem:[%s4 + $0x40] sm:$0xff]
      %v466 = vld [vmem:[%s4 + $0x48] sm:$0xff]
      %v467 = vld [vmem:[%s4 + $0x50] sm:$0xff]
      %v468 = vld [vmem:[%s4 + $0x58] sm:$0xff]
      %v469 = vld [vmem:[%s4 + $0x60] sm:$0xff]
      %v470 = vld [vmem:[%s4 + $0x68] sm:$0xff]
      %v471 = vld [vmem:[%s4 + $0x70] sm:$0xff]
      %v472 = vld [vmem:[%s4 + $0x78] sm:$0xff]
      %v473 = vld [vmem:[%s5] sm:$0x1]
      %v475 = vlaneseq
      %v476 = vshrl.u32 %v475, 7
      %v477 = vsub.s32 0, %v476
      %v478 = vrot.slane %v473, %v477
      %480 = vmatprep.subr.mxu0 0.0
      %481 = vmatpush1.msra.mxu0 %v472
      %482 = vmatprep.subr.mxu0 0.0
      %483 = vmatpush1.msra.mxu0 %v471
      %484 = vmatprep.subr.mxu0 0.0
      %485 = vmatpush1.msra.mxu0 %v470
      %486 = vmatprep.subr.mxu0 0.0
      %487 = vmatpush1.msra.mxu0 %v469
      %488 = vmatprep.subr.mxu0 0.0
      %489 = vmatpush1.msra.mxu0 %v468
      %490 = vmatprep.subr.mxu0 0.0
      %491 = vmatpush1.msra.mxu0 %v467
      %492 = vmatprep.subr.mxu0 0.0
      %493 = vmatpush1.msra.mxu0 %v466
      %494 = vmatprep.subr.mxu0 0.0
      %495 = vmatpush1.msra.mxu0 %v465
      %496 = vmatprep.subr.mxu0 0.0
      %497 = vmatpush1.msra.mxu0 %v464
      %498 = vmatprep.subr.mxu0 0.0
      %499 = vmatpush1.msra.mxu0 %v463
      %500 = vmatprep.subr.mxu0 0.0
      %501 = vmatpush1.msra.mxu0 %v462
      %502 = vmatprep.subr.mxu0 0.0
      %503 = vmatpush1.msra.mxu0 %v461
      %504 = vmatprep.subr.mxu0 0.0
      %505 = vmatpush1.msra.mxu0 %v460
      %506 = vmatprep.subr.mxu0 0.0
      %507 = vmatpush1.msra.mxu0 %v459
      %508 = vmatprep.subr.mxu0 0.0
      %509 = vmatpush1.msra.mxu0 %v458
      %510 = vmatprep.subr.mxu0 0.0
      %511 = vmatpush1.msra.mxu0 %v457
      %512 = vmatprep.subr.mxu0 0.0
      %513 = vmatpush2.msra.mxu0 0.0
      %514 = vmatprep.subr.mxu0 0.0
      %515 = vmatpush2.msra.mxu0 0.0
      %516 = vmatprep.subr.mxu0 0.0
      %517 = vmatpush2.msra.mxu0 0.0
      %518 = vmatprep.subr.mxu0 0.0
      %519 = vmatpush2.msra.mxu0 0.0
      %520 = vmatprep.subr.mxu0 0.0
      %521 = vmatpush2.msra.mxu0 0.0
      %522 = vmatprep.subr.mxu0 0.0
      %523 = vmatpush2.msra.mxu0 0.0
      %524 = vmatprep.subr.mxu0 0.0
      %525 = vmatpush2.msra.mxu0 0.0
      %526 = vmatprep.subr.mxu0 0.0
      %527 = vmatpush2.msra.mxu0 0.0
      %528 = vmatprep.subr.mxu0 0.0
      %529 = vmatpush2.msra.mxu0 0.0
      %530 = vmatprep.subr.mxu0 0.0
      %531 = vmatpush2.msra.mxu0 0.0
      %532 = vmatprep.subr.mxu0 0.0
      %533 = vmatpush2.msra.mxu0 0.0
      %534 = vmatprep.subr.mxu0 0.0
      %535 = vmatpush2.msra.mxu0 0.0
      %536 = vmatprep.subr.mxu0 0.0
      %537 = vmatpush2.msra.mxu0 0.0
      %538 = vmatprep.subr.mxu0 0.0
      %539 = vmatpush2.msra.mxu0 0.0
      %540 = vmatprep.subr.mxu0 0.0
      %541 = vmatpush2.msra.mxu0 0.0
      %542 = vmatprep.subr.mxu0 0.0
      %543 = vmatpush2.msra.mxu0 0.0
      %544 = vmatprep.mubr.f32.mxu0 0.0
      %545 = vmatmul.mubr.f32.gmra.mxu0 %v456
      %v546 = vpop.f32.mrf.mxu0
      %v547 = vadd.f32 %v478, %v546
      %v548 = vpop.f32.mrf.mxu0
      %549 = vdwg.mxu0
      %v550 = vtanh.pop %v547
      %v551 = vld [vmem:[%s6] sm:$0xff]
      %v552 = vld [vmem:[%s6 + $0x8] sm:$0xff]
      %v553 = vld [vmem:[%s6 + $0x10] sm:$0xff]
      %v554 = vld [vmem:[%s6 + $0x18] sm:$0xff]
      %v555 = vld [vmem:[%s6 + $0x20] sm:$0xff]
      %v556 = vld [vmem:[%s6 + $0x28] sm:$0xff]
      %v557 = vld [vmem:[%s6 + $0x30] sm:$0xff]
      %v558 = vld [vmem:[%s6 + $0x38] sm:$0xff]
      %v559 = vld [vmem:[%s6 + $0x40] sm:$0xff]
      %v560 = vld [vmem:[%s6 + $0x48] sm:$0xff]
      %v561 = vld [vmem:[%s6 + $0x50] sm:$0xff]
      %v562 = vld [vmem:[%s6 + $0x58] sm:$0xff]
      %v563 = vld [vmem:[%s6 + $0x60] sm:$0xff]
      %v564 = vld [vmem:[%s6 + $0x68] sm:$0xff]
      %v565 = vld [vmem:[%s6 + $0x70] sm:$0xff]
      %v566 = vld [vmem:[%s6 + $0x78] sm:$0xff]
      %v567 = vld [vmem:[%s7] sm:$0x1]
      %v569 = vlaneseq
      %v570 = vshrl.u32 %v569, 7
      %v571 = vsub.s32 0, %v570
      %v572 = vrot.slane %v567, %v571
      %574 = vmatprep.subr.mxu0 0.0
      %575 = vmatpush1.msra.mxu0 %v566
      %576 = vmatprep.subr.mxu0 0.0
      %577 = vmatpush1.msra.mxu0 %v565
      %578 = vmatprep.subr.mxu0 0.0
      %579 = vmatpush1.msra.mxu0 %v564
      %580 = vmatprep.subr.mxu0 0.0
      %581 = vmatpush1.msra.mxu0 %v563
      %582 = vmatprep.subr.mxu0 0.0
      %583 = vmatpush1.msra.mxu0 %v562
      %584 = vmatprep.subr.mxu0 0.0
      %585 = vmatpush1.msra.mxu0 %v561
      %586 = vmatprep.subr.mxu0 0.0
      %587 = vmatpush1.msra.mxu0 %v560
      %588 = vmatprep.subr.mxu0 0.0
      %589 = vmatpush1.msra.mxu0 %v559
      %590 = vmatprep.subr.mxu0 0.0
      %591 = vmatpush1.msra.mxu0 %v558
      %592 = vmatprep.subr.mxu0 0.0
      %593 = vmatpush1.msra.mxu0 %v557
      %594 = vmatprep.subr.mxu0 0.0
      %595 = vmatpush1.msra.mxu0 %v556
      %596 = vmatprep.subr.mxu0 0.0
      %597 = vmatpush1.msra.mxu0 %v555
      %598 = vmatprep.subr.mxu0 0.0
      %599 = vmatpush1.msra.mxu0 %v554
      %600 = vmatprep.subr.mxu0 0.0
      %601 = vmatpush1.msra.mxu0 %v553
      %602 = vmatprep.subr.mxu0 0.0
      %603 = vmatpush1.msra.mxu0 %v552
      %604 = vmatprep.subr.mxu0 0.0
      %605 = vmatpush1.msra.mxu0 %v551
      %606 = vmatprep.subr.mxu0 0.0
      %607 = vmatpush2.msra.mxu0 0.0
      %608 = vmatprep.subr.mxu0 0.0
      %609 = vmatpush2.msra.mxu0 0.0
      %610 = vmatprep.subr.mxu0 0.0
      %611 = vmatpush2.msra.mxu0 0.0
      %612 = vmatprep.subr.mxu0 0.0
      %613 = vmatpush2.msra.mxu0 0.0
      %614 = vmatprep.subr.mxu0 0.0
      %615 = vmatpush2.msra.mxu0 0.0
      %616 = vmatprep.subr.mxu0 0.0
      %617 = vmatpush2.msra.mxu0 0.0
      %618 = vmatprep.subr.mxu0 0.0
      %619 = vmatpush2.msra.mxu0 0.0
      %620 = vmatprep.subr.mxu0 0.0
      %621 = vmatpush2.msra.mxu0 0.0
      %622 = vmatprep.subr.mxu0 0.0
      %623 = vmatpush2.msra.mxu0 0.0
      %624 = vmatprep.subr.mxu0 0.0
      %625 = vmatpush2.msra.mxu0 0.0
      %626 = vmatprep.subr.mxu0 0.0
      %627 = vmatpush2.msra.mxu0 0.0
      %628 = vmatprep.subr.mxu0 0.0
      %629 = vmatpush2.msra.mxu0 0.0
      %630 = vmatprep.subr.mxu0 0.0
      %631 = vmatpush2.msra.mxu0 0.0
      %632 = vmatprep.subr.mxu0 0.0
      %633 = vmatpush2.msra.mxu0 0.0
      %634 = vmatprep.subr.mxu0 0.0
      %635 = vmatpush2.msra.mxu0 0.0
      %636 = vmatprep.subr.mxu0 0.0
      %637 = vmatpush2.msra.mxu0 0.0
      %638 = vmatprep.mubr.f32.mxu0 0.0
      %639 = vmatmul.mubr.f32.gmra.mxu0 %v550
      %v640 = vpop.f32.mrf.mxu0
      %v641 = vadd.f32 %v572, %v640
      %v642 = vpop.f32.mrf.mxu0
      %643 = vdwg.mxu0
      %v644 = vld [vmem:[%s367] sm:$0xff]
      %v645 = vsub.f32 %v644, %v641
      %v646 = vmul.f32 %v645, %v645
      %v647 = vld [vmem:[%s8] sm:$0x1]
      %v649 = vlaneseq
      %v650 = vshrl.u32 %v649, 7
      %v651 = vsub.s32 0, %v650
      %v652 = vrot.slane %v647, %v651
      %v654 = vmul.f32 %v646, %v652
      %vm655 = vcmask 31744
      %v656 = vsel %vm655, %v654, 0.0
      %657 = vadd.xlane.f32.xlu0 %v656
      %v658 = vpop.xlane.xlu0 %657
      %v659 = vld [vmem:[%s9] sm:$0x1]
      %v661 = vlaneseq
      %v662 = vshrl.u32 %v661, 7
      %v663 = vsub.s32 0, %v662
      %v664 = vrot.slane %v659, %v663
      %v666 = vmul.f32 %v658, %v664
      %v667 = vadd.f32 %v641, %v666
      %vm668 = vcmask 64512
      %669 = vst.msk [vmem:[%s371] sm:$0xff] %vm668, %v667
      %p670 = scmp.lt.s32.totalorder %s21, 1
      %s671 = scalar_select %p670, %s21, 1
      %s672 = smul.addr %s671, 8
      %s673 = scalar_lea.vmem %s10, %s672
      // Predicated region
      $region61: #{tpu_custom_call.1} parent=59 // pred_check
        %p674 = pneg %p259
      $region62: #{tpu_custom_call.1} parent=59 // pred_check_branch
        %676 = sbr.rel (%p674) target = $region64
      $region63: #{tpu_custom_call.1} parent=59 // pred_region
        _
      $region64: #{tpu_custom_call.1} parent=59 // pred_fallthru
        _
    $region60: #{tpu_custom_call.1} parent=5 // pred_fallthru
      _
    %p677 = scmp.le.s32.totalorder 2, %s16
    // Predicated region
    $region65: #{tpu_custom_call.1} parent=5 // pred_check
      %p678 = pneg %p677
    $region66: #{tpu_custom_call.1} parent=5 // pred_check_branch
      %680 = sbr.rel (%p678) target = $region68
    $region67: #{tpu_custom_call.1} parent=5 // pred_region
      %s681 = ssub.s32 %s16, 2
      // Predicated region
      $region69: #{tpu_custom_call.1} parent=67 // pred_check
        %p682 = pneg %p265
      $region70: #{tpu_custom_call.1} parent=67 // pred_check_branch
        %684 = sbr.rel (%p682) target = $region72
      $region71: #{tpu_custom_call.1} parent=67 // pred_region
        %p685 = scmp.lt.s32.totalorder %s22, 1
        %s686 = scalar_select %p685, %s22, 1
        %s687 = smul.addr %s686, 8
        %s688 = scalar_lea.vmem %s10, %s687
      $region72: #{tpu_custom_call.1} parent=67 // pred_fallthru
        _
    $region68: #{tpu_custom_call.1} parent=5 // pred_fallthru
      _
  $region6: #{tpu_custom_call.1} parent=0 // loop_footer
    %s20 = sadd.s32 1, %s16
  $region7: #{tpu_custom_call.1} parent=0 // loop_footer_branch
    %15 = sbr.rel target = $region3
  $region8: #{tpu_custom_call.1} parent=0 // loop_exit
    _

</llo_original>
